<compile_context>
chip_gen: v5e
topology: v5e:2x2
jax: 0.10.0
libtpu: 0.0.40
codegen_flags: <defaults>
</compile_context>

<pallas_src>
import functools

import numpy as np
import jax
import jax.numpy as jnp
from jax import lax
from jax.experimental import pallas as pl
from jax.experimental.pallas import tpu as pltpu

SMOOTH = 1e-7
LANE = 128                      # TPU lane width: last dim of every tile
TARGET_STREAM_BYTES = 6 << 20   # ~6 MiB of HBM traffic per grid step (overhead amortization)
VMEM_CAP_BYTES = 28 << 20       # conservative working-set cap (v7x: 64 MiB physical VMEM)
TEMP_F32_FACTOR = 8             # bound on live f32 temporaries per spatial element in-kernel


def _dice_partial_kernel(labels_ref, pred_ref, ci_ref, cd_ref, *,
                         nr_classes, tile_rows, total_rows, chunk_tiles,
                         acc_rows, ragged):
    """Accumulate per-class intersection / denominator partial sums.

    labels_ref: (1, tile_rows, LANE)  int (any width)  ground-truth class ids
    pred_ref:   (C, tile_rows, LANE)  float            predicted probabilities
    ci_ref:     (C, acc_rows, LANE)   f32              resident accumulator (output)
    cd_ref:     (C, acc_rows, LANE)   f32              resident accumulator (output)
    """
    k = pl.program_id(2)

    @pl.when(k == 0)
    def _init():
        ci_ref[...] = jnp.zeros_like(ci_ref)
        cd_ref[...] = jnp.zeros_like(cd_ref)

    labels = labels_ref[0].astype(jnp.int32)                  # (tile_rows, LANE)

    if ragged:
        # The last row-tile may read past the end of the array (Pallas pads the
        # boundary block with unspecified data): mask those rows.  This branch
        # is emitted only when tiles do not divide the row count (static).
        tile_idx = pl.program_id(1) * chunk_tiles + k
        rows_left = total_rows - tile_idx * tile_rows
        row_id = lax.broadcasted_iota(jnp.int32, (tile_rows, LANE), 0)
        valid = row_id < rows_left
        labels = jnp.where(valid, labels, nr_classes)          # sentinel: matches no class

    def fold(x):
        # (tile_rows, LANE) -> (acc_rows, LANE) using VALU-only slab adds; the
        # expensive cross-lane reduction is deferred to tiny JAX glue.
        if acc_rows == 8:
            return x.reshape(tile_rows // 8, 8, LANE).sum(axis=0)
        return jnp.sum(x, axis=0, keepdims=True)               # tiny-tile fallback

    for c in range(nr_classes):                                # static, small class loop
        pred_c = pred_ref[c].astype(jnp.float32)               # (tile_rows, LANE)
        if ragged:
            pred_c = jnp.where(valid, pred_c, 0.0)
        is_c = labels == c
        inter = jnp.where(is_c, pred_c, 0.0)                   # one_hot * pred, via select
        denom = jnp.where(is_c, pred_c + 1.0, pred_c)          # one_hot + pred, via select
        ci_ref[c] += fold(inter)
        cd_ref[c] += fold(denom)


def dice_partials(labels_rows, pred_rows, *, target_stream_bytes=None):
    """Per-(batch, class) unweighted sum(one_hot*pred) and sum(one_hot + pred).

    labels_rows: [B, 1, R, 128] integer class ids
    pred_rows:   [B, C, R, 128] float probabilities
    Returns (class_intersect [B, C] f32, class_denom [B, C] f32).
    """
    B, C, R, lane = pred_rows.shape
    assert lane == LANE and labels_rows.shape == (B, 1, R, LANE)
    pred_bytes = pred_rows.dtype.itemsize
    label_bytes = labels_rows.dtype.itemsize
    target = TARGET_STREAM_BYTES if target_stream_bytes is None else target_stream_bytes

    # --- row-tile size: amortize per-step overhead, stay inside the VMEM budget ---
    stream_row = LANE * (C * pred_bytes + label_bytes)         # HBM bytes per row of 128 px
    vmem_row = 2 * stream_row + TEMP_F32_FACTOR * LANE * 4     # dbl-buffered inputs + temps
    ts = max(min(target // stream_row, (VMEM_CAP_BYTES - (2 << 20)) // vmem_row), 8)
    if ts >= R:
        ts = R                                                 # full extent (any size) is legal
    else:
        ts = (ts // 8) * 8                                     # (8, 128) tiling constraint
    n_r = pl.cdiv(R, ts)
    ragged = (R % ts) != 0
    acc_rows = 8 if ts % 8 == 0 else 1

    # 2-way split of the row axis so both v7x TensorCores get work even at B == 1.
    n_par = 2 if (n_r % 2 == 0 and n_r >= 2) else 1
    n_chunk = n_r // n_par

    kernel = functools.partial(
        _dice_partial_kernel, nr_classes=C, tile_rows=ts, total_rows=R,
        chunk_tiles=n_chunk, acc_rows=acc_rows, ragged=ragged)

    out_shape = (
        jax.ShapeDtypeStruct((B, n_par, C, acc_rows, LANE), jnp.float32),
        jax.ShapeDtypeStruct((B, n_par, C, acc_rows, LANE), jnp.float32),
    )
    grid_spec = pltpu.PrefetchScalarGridSpec(
        num_scalar_prefetch=0,
        grid=(B, n_par, n_chunk),                              # reduction axis last
        in_specs=[
            pl.BlockSpec((None, 1, ts, LANE), lambda b, s, k: (b, 0, s * n_chunk + k, 0)),
            pl.BlockSpec((None, C, ts, LANE), lambda b, s, k: (b, 0, s * n_chunk + k, 0)),
        ],
        out_specs=[
            pl.BlockSpec((None, None, C, acc_rows, LANE), lambda b, s, k: (b, s, 0, 0, 0)),
            pl.BlockSpec((None, None, C, acc_rows, LANE), lambda b, s, k: (b, s, 0, 0, 0)),
        ],
    )

    in_block = C * ts * LANE * pred_bytes + ts * LANE * label_bytes
    out_block = 2 * C * acc_rows * LANE * 4
    vmem_need = 2 * in_block + TEMP_F32_FACTOR * ts * LANE * 4 + 2 * out_block
    vmem_limit = int(min(max(vmem_need + (4 << 20), 8 << 20), VMEM_CAP_BYTES))

    cost = pl.CostEstimate(
        flops=7 * B * C * R * LANE,
        transcendentals=0,
        bytes_accessed=B * C * R * LANE * pred_bytes + B * R * LANE * label_bytes
        + 2 * B * n_par * C * acc_rows * LANE * 4,
    )

    ci_p, cd_p = pl.pallas_call(
        kernel,
        out_shape=out_shape,
        grid_spec=grid_spec,
        compiler_params=pltpu.CompilerParams(
            dimension_semantics=("parallel", "parallel", "arbitrary"),
            vmem_limit_bytes=vmem_limit,
        ),
        cost_estimate=cost,
    )(labels_rows, pred_rows)

    # Tiny cross-lane reductions done once, outside the kernel.
    return jnp.sum(ci_p, axis=(1, 3, 4)), jnp.sum(cd_p, axis=(1, 3, 4))


def dice_loss(y_true, y_pred, weights, smooth=SMOOTH, *, target_stream_bytes=None):
    """Generalized multi-class Dice loss (matches TissueLabeling `Dice.forward`).

    y_true:  [B, 1, H, W] integer class ids (int8/uint8 upstream = least HBM traffic)
    y_pred:  [B, C, H, W] class probabilities (streamed in their native dtype)
    weights: [C] per-class weights (1/pixel_count, normalized)
    Returns (dice_loss scalar, per-class dice [C]).
    """
    B, C, H, W = y_pred.shape
    HW = H * W

    if not jnp.issubdtype(y_true.dtype, jnp.integer):
        y_true = y_true.astype(jnp.int32)
    labels = y_true.reshape(B, 1, HW)
    preds = y_pred.reshape(B, C, HW)

    rows = pl.cdiv(HW, LANE)
    hw_pad = rows * LANE
    if hw_pad != HW:
        # TODO(synk): this pad is a full HBM copy; prefer H*W % 128 == 0 shapes.
        # Sentinel label == C gives an empty one-hot row; pred == 0 adds nothing.
        if C > jnp.iinfo(labels.dtype).max:
            labels = labels.astype(jnp.int32)
        labels = jnp.pad(labels, ((0, 0), (0, 0), (0, hw_pad - HW)), constant_values=C)
        preds = jnp.pad(preds, ((0, 0), (0, 0), (0, hw_pad - HW)))
    labels = labels.reshape(B, 1, rows, LANE)
    preds = preds.reshape(B, C, rows, LANE)

    ci, cd = dice_partials(labels, preds, target_stream_bytes=target_stream_bytes)

    # Per-class weights applied to the tiny [B, C] partials (not inside the kernel).
    w = weights.reshape(1, C).astype(jnp.float32)
    class_intersect = w * ci                                   # [B, C]
    class_denom = w * cd                                       # [B, C]
    intersect = jnp.sum(class_intersect, axis=1)               # [B]
    denom = jnp.sum(class_denom, axis=1)                       # [B]
    class_dice = jnp.mean(2.0 * class_intersect / (class_denom + smooth), axis=0)  # [C]
    dice_coeff = jnp.mean(2.0 * intersect / (denom + smooth))
    return 1.0 - dice_coeff, class_dice


def _reference(y_true, y_pred, weights, smooth=SMOOTH):
    # Pure-JAX reference mirroring the PyTorch forward (all f32).
    B, C, H, W = y_pred.shape
    oh = jax.nn.one_hot(y_true[:, 0], C, dtype=jnp.float32)        # [B,H,W,C]
    oh = jnp.transpose(oh, (0, 3, 1, 2))                           # [B,C,H,W]
    wv = weights.reshape(1, -1, 1, 1).astype(jnp.float32)
    ci = jnp.sum(wv * (oh * y_pred), axis=(2, 3))
    cd = jnp.sum(wv * (oh + y_pred), axis=(2, 3))
    inter = jnp.sum(ci, axis=1)
    den = jnp.sum(cd, axis=1)
    class_dice = jnp.mean(2.0 * ci / (cd + smooth), axis=0)
    dice_coeff = jnp.mean(2.0 * inter / (den + smooth))
    return 1.0 - dice_coeff, class_dice


def _run_case(seed, B, C, H, W, target_stream_bytes=None):
    key = jax.random.PRNGKey(seed)
    k1, k2, k3 = jax.random.split(key, 3)

    # Synthetic pixel_counts.npy -> class weights (same math as Dice.__init__).
    pixel_counts = jax.random.randint(k3, (C,), 0, 1000).astype(jnp.float32)
    weights = 1.0 / pixel_counts
    weights = jnp.where(jnp.isinf(weights), 0.0, weights)
    weights = weights / jnp.sum(weights)

    # Labels stored compactly (int8) upstream; probabilities stay f32 (no cast pass).
    y_true = jax.random.randint(k1, (B, 1, H, W), 0, C, dtype=jnp.int32).astype(jnp.int8)
    y_pred = jax.nn.softmax(jax.random.normal(k2, (B, C, H, W), dtype=jnp.float32), axis=1)

    fn = jax.jit(functools.partial(dice_loss, target_stream_bytes=target_stream_bytes))
    loss, class_dice = fn(y_true, y_pred, weights)
    loss = jax.block_until_ready(loss)
    class_dice = jax.block_until_ready(class_dice)

    ref_loss, ref_class_dice = _reference(y_true, y_pred, weights)
    assert np.allclose(np.asarray(loss), np.asarray(ref_loss), atol=1e-5, rtol=1e-4), \
        (loss, ref_loss)
    assert np.allclose(np.asarray(class_dice), np.asarray(ref_class_dice),
                       atol=1e-5, rtol=1e-4), (class_dice, ref_class_dice)


if __name__ == "__main__":
    # Demo shape implied by the module: B=2, C=4, 16x16 images (single full tile).
    _run_case(0, B=2, C=4, H=16, W=16)
    # Force tiny 8-row tiles: multi-tile accumulation + 2-way TensorCore split.
    _run_case(1, B=2, C=4, H=64, W=64, target_stream_bytes=20_000)
    # H*W not a multiple of 128 + ragged last row-tile (in-kernel masking path).
    _run_case(2, B=1, C=4, H=60, W=60, target_stream_bytes=20_000)
    print("KERNEL_OK")
</pallas_src>

<mosaic_0001>
module attributes {stable_mosaic.version = 11 : i64} {
  func.func @_dice_partial_kernel(%arg0: i32, %arg1: i32, %arg2: i32, %arg3: memref<1x1x2x128xi8, #tpu.memory_space<vmem>>, %arg4: memref<1x4x2x128xf32, #tpu.memory_space<vmem>>, %arg5: memref<1x1x4x1x128xf32, #tpu.memory_space<vmem>>, %arg6: memref<1x1x4x1x128xf32, #tpu.memory_space<vmem>>) attributes {dimension_semantics = [#tpu.dimension_semantics<parallel>, #tpu.dimension_semantics<parallel>, #tpu.dimension_semantics<arbitrary>], iteration_bounds = array<i64: 2, 1, 1>, scalar_prefetch = 0 : i64, scratch_operands = 0 : i64, tpu.core_type = #tpu.core_type<tc>, window_params = [{transform_indices = @transform_0, window_bounds = array<i64: 1, 1, 2, 128>}, {transform_indices = @transform_1, window_bounds = array<i64: 1, 4, 2, 128>}, {transform_indices = @transform_2, window_bounds = array<i64: 1, 1, 4, 1, 128>}, {transform_indices = @transform_3, window_bounds = array<i64: 1, 1, 4, 1, 128>}]} {
    %c0_i32 = arith.constant 0 : i32
    %0 = arith.cmpi eq, %arg2, %c0_i32 : i32
    %1 = arith.extui %0 : i1 to i32
    %c0_i32_0 = arith.constant 0 : i32
    %2 = arith.cmpi ne, %1, %c0_i32_0 : i32
    scf.if %2 {
      %cst_113 = arith.constant 0.000000e+00 : f32
      %106 = vector.broadcast %cst_113 : f32 to vector<4x1x128xf32>
      %c0_114 = arith.constant 0 : index
      %c0_115 = arith.constant 0 : index
      %c0_116 = arith.constant 0 : index
      %c0_117 = arith.constant 0 : index
      %c0_118 = arith.constant 0 : index
      %107 = vector.load %arg5[%c0_114, %c0_115, %c0_116, %c0_117, %c0_118] : memref<1x1x4x1x128xf32, #tpu.memory_space<vmem>>, vector<1x1x4x1x128xf32>
      %108 = vector.shape_cast %107 : vector<1x1x4x1x128xf32> to vector<4x1x128xf32>
      %109 = vector.shape_cast %106 : vector<4x1x128xf32> to vector<1x1x4x1x128xf32>
      tpu.vector_store %arg5[%c0_114, %c0_115, %c0_116, %c0_117, %c0_118], %109 {strides = array<i32>} : memref<1x1x4x1x128xf32, #tpu.memory_space<vmem>>, vector<1x1x4x1x128xf32>,
      %cst_119 = arith.constant 0.000000e+00 : f32
      %110 = vector.broadcast %cst_119 : f32 to vector<4x1x128xf32>
      %c0_120 = arith.constant 0 : index
      %c0_121 = arith.constant 0 : index
      %c0_122 = arith.constant 0 : index
      %c0_123 = arith.constant 0 : index
      %c0_124 = arith.constant 0 : index
      %111 = vector.load %arg6[%c0_120, %c0_121, %c0_122, %c0_123, %c0_124] : memref<1x1x4x1x128xf32, #tpu.memory_space<vmem>>, vector<1x1x4x1x128xf32>
      %112 = vector.shape_cast %111 : vector<1x1x4x1x128xf32> to vector<4x1x128xf32>
      %113 = vector.shape_cast %110 : vector<4x1x128xf32> to vector<1x1x4x1x128xf32>
      tpu.vector_store %arg6[%c0_120, %c0_121, %c0_122, %c0_123, %c0_124], %113 {strides = array<i32>} : memref<1x1x4x1x128xf32, #tpu.memory_space<vmem>>, vector<1x1x4x1x128xf32>,
    } else {
    }
    %c0 = arith.constant 0 : index
    %c0_1 = arith.constant 0 : index
    %c0_2 = arith.constant 0 : index
    %c0_3 = arith.constant 0 : index
    %3 = vector.load %arg3[%c0, %c0_1, %c0_2, %c0_3] : memref<1x1x2x128xi8, #tpu.memory_space<vmem>>, vector<1x1x2x128xi8>
    %4 = vector.shape_cast %3 : vector<1x1x2x128xi8> to vector<2x128xi8>
    %5 = arith.extsi %4 : vector<2x128xi8> to vector<2x128xi32>
    %c0_4 = arith.constant 0 : index
    %c0_5 = arith.constant 0 : index
    %c0_6 = arith.constant 0 : index
    %c0_7 = arith.constant 0 : index
    %6 = vector.load %arg4[%c0_4, %c0_5, %c0_6, %c0_7] : memref<1x4x2x128xf32, #tpu.memory_space<vmem>>, vector<1x1x2x128xf32>
    %7 = vector.shape_cast %6 : vector<1x1x2x128xf32> to vector<2x128xf32>
    %c0_i32_8 = arith.constant 0 : i32
    %8 = vector.broadcast %c0_i32_8 : i32 to vector<2x128xi32>
    %9 = arith.cmpi eq, %5, %8 : vector<2x128xi32>
    %cst = arith.constant 0.000000e+00 : f32
    %10 = vector.broadcast %cst : f32 to vector<2x128xf32>
    %11 = arith.select %9, %7, %10 : vector<2x128xi1>, vector<2x128xf32>
    %cst_9 = arith.constant 1.000000e+00 : f32
    %12 = vector.broadcast %cst_9 : f32 to vector<2x128xf32>
    %13 = arith.addf %7, %12 : vector<2x128xf32>
    %14 = arith.select %9, %13, %7 : vector<2x128xi1>, vector<2x128xf32>
    %c0_10 = arith.constant 0 : index
    %c0_11 = arith.constant 0 : index
    %c0_12 = arith.constant 0 : index
    %c0_13 = arith.constant 0 : index
    %c0_14 = arith.constant 0 : index
    %15 = vector.load %arg5[%c0_10, %c0_11, %c0_12, %c0_13, %c0_14] : memref<1x1x4x1x128xf32, #tpu.memory_space<vmem>>, vector<1x1x1x1x128xf32>
    %16 = vector.shape_cast %15 : vector<1x1x1x1x128xf32> to vector<1x128xf32>
    %cst_15 = arith.constant dense<0.000000e+00> : vector<128xf32>
    %17 = vector.multi_reduction <add>, %11, %cst_15 [0] : vector<2x128xf32> to vector<128xf32>
    %18 = vector.shape_cast %17 : vector<128xf32> to vector<1x128xf32>
    %19 = arith.addf %16, %18 : vector<1x128xf32>
    %c0_16 = arith.constant 0 : index
    %c0_17 = arith.constant 0 : index
    %c0_18 = arith.constant 0 : index
    %c0_19 = arith.constant 0 : index
    %c0_20 = arith.constant 0 : index
    %20 = vector.load %arg5[%c0_16, %c0_17, %c0_18, %c0_19, %c0_20] : memref<1x1x4x1x128xf32, #tpu.memory_space<vmem>>, vector<1x1x1x1x128xf32>
    %21 = vector.shape_cast %20 : vector<1x1x1x1x128xf32> to vector<1x128xf32>
    %22 = vector.shape_cast %19 : vector<1x128xf32> to vector<1x1x1x1x128xf32>
    tpu.vector_store %arg5[%c0_16, %c0_17, %c0_18, %c0_19, %c0_20], %22 {strides = array<i32>} : memref<1x1x4x1x128xf32, #tpu.memory_space<vmem>>, vector<1x1x1x1x128xf32>,
    %c0_21 = arith.constant 0 : index
    %c0_22 = arith.constant 0 : index
    %c0_23 = arith.constant 0 : index
    %c0_24 = arith.constant 0 : index
    %c0_25 = arith.constant 0 : index
    %23 = vector.load %arg6[%c0_21, %c0_22, %c0_23, %c0_24, %c0_25] : memref<1x1x4x1x128xf32, #tpu.memory_space<vmem>>, vector<1x1x1x1x128xf32>
    %24 = vector.shape_cast %23 : vector<1x1x1x1x128xf32> to vector<1x128xf32>
    %cst_26 = arith.constant dense<0.000000e+00> : vector<128xf32>
    %25 = vector.multi_reduction <add>, %14, %cst_26 [0] : vector<2x128xf32> to vector<128xf32>
    %26 = vector.shape_cast %25 : vector<128xf32> to vector<1x128xf32>
    %27 = arith.addf %24, %26 : vector<1x128xf32>
    %c0_27 = arith.constant 0 : index
    %c0_28 = arith.constant 0 : index
    %c0_29 = arith.constant 0 : index
    %c0_30 = arith.constant 0 : index
    %c0_31 = arith.constant 0 : index
    %28 = vector.load %arg6[%c0_27, %c0_28, %c0_29, %c0_30, %c0_31] : memref<1x1x4x1x128xf32, #tpu.memory_space<vmem>>, vector<1x1x1x1x128xf32>
    %29 = vector.shape_cast %28 : vector<1x1x1x1x128xf32> to vector<1x128xf32>
    %30 = vector.shape_cast %27 : vector<1x128xf32> to vector<1x1x1x1x128xf32>
    tpu.vector_store %arg6[%c0_27, %c0_28, %c0_29, %c0_30, %c0_31], %30 {strides = array<i32>} : memref<1x1x4x1x128xf32, #tpu.memory_space<vmem>>, vector<1x1x1x1x128xf32>,
    %c0_32 = arith.constant 0 : index
    %c1 = arith.constant 1 : index
    %c0_33 = arith.constant 0 : index
    %c0_34 = arith.constant 0 : index
    %31 = vector.load %arg4[%c0_32, %c1, %c0_33, %c0_34] : memref<1x4x2x128xf32, #tpu.memory_space<vmem>>, vector<1x1x2x128xf32>
    %32 = vector.shape_cast %31 : vector<1x1x2x128xf32> to vector<2x128xf32>
    %c1_i32 = arith.constant 1 : i32
    %33 = vector.broadcast %c1_i32 : i32 to vector<2x128xi32>
    %34 = arith.cmpi eq, %5, %33 : vector<2x128xi32>
    %cst_35 = arith.constant 0.000000e+00 : f32
    %35 = vector.broadcast %cst_35 : f32 to vector<2x128xf32>
    %36 = arith.select %34, %32, %35 : vector<2x128xi1>, vector<2x128xf32>
    %cst_36 = arith.constant 1.000000e+00 : f32
    %37 = vector.broadcast %cst_36 : f32 to vector<2x128xf32>
    %38 = arith.addf %32, %37 : vector<2x128xf32>
    %39 = arith.select %34, %38, %32 : vector<2x128xi1>, vector<2x128xf32>
    %c0_37 = arith.constant 0 : index
    %c0_38 = arith.constant 0 : index
    %c1_39 = arith.constant 1 : index
    %c0_40 = arith.constant 0 : index
    %c0_41 = arith.constant 0 : index
    %40 = vector.load %arg5[%c0_37, %c0_38, %c1_39, %c0_40, %c0_41] : memref<1x1x4x1x128xf32, #tpu.memory_space<vmem>>, vector<1x1x1x1x128xf32>
    %41 = vector.shape_cast %40 : vector<1x1x1x1x128xf32> to vector<1x128xf32>
    %cst_42 = arith.constant dense<0.000000e+00> : vector<128xf32>
    %42 = vector.multi_reduction <add>, %36, %cst_42 [0] : vector<2x128xf32> to vector<128xf32>
    %43 = vector.shape_cast %42 : vector<128xf32> to vector<1x128xf32>
    %44 = arith.addf %41, %43 : vector<1x128xf32>
    %c0_43 = arith.constant 0 : index
    %c0_44 = arith.constant 0 : index
    %c1_45 = arith.constant 1 : index
    %c0_46 = arith.constant 0 : index
    %c0_47 = arith.constant 0 : index
    %45 = vector.load %arg5[%c0_43, %c0_44, %c1_45, %c0_46, %c0_47] : memref<1x1x4x1x128xf32, #tpu.memory_space<vmem>>, vector<1x1x1x1x128xf32>
    %46 = vector.shape_cast %45 : vector<1x1x1x1x128xf32> to vector<1x128xf32>
    %47 = vector.shape_cast %44 : vector<1x128xf32> to vector<1x1x1x1x128xf32>
    tpu.vector_store %arg5[%c0_43, %c0_44, %c1_45, %c0_46, %c0_47], %47 {strides = array<i32>} : memref<1x1x4x1x128xf32, #tpu.memory_space<vmem>>, vector<1x1x1x1x128xf32>,
    %c0_48 = arith.constant 0 : index
    %c0_49 = arith.constant 0 : index
    %c1_50 = arith.constant 1 : index
    %c0_51 = arith.constant 0 : index
    %c0_52 = arith.constant 0 : index
    %48 = vector.load %arg6[%c0_48, %c0_49, %c1_50, %c0_51, %c0_52] : memref<1x1x4x1x128xf32, #tpu.memory_space<vmem>>, vector<1x1x1x1x128xf32>
    %49 = vector.shape_cast %48 : vector<1x1x1x1x128xf32> to vector<1x128xf32>
    %cst_53 = arith.constant dense<0.000000e+00> : vector<128xf32>
    %50 = vector.multi_reduction <add>, %39, %cst_53 [0] : vector<2x128xf32> to vector<128xf32>
    %51 = vector.shape_cast %50 : vector<128xf32> to vector<1x128xf32>
    %52 = arith.addf %49, %51 : vector<1x128xf32>
    %c0_54 = arith.constant 0 : index
    %c0_55 = arith.constant 0 : index
    %c1_56 = arith.constant 1 : index
    %c0_57 = arith.constant 0 : index
    %c0_58 = arith.constant 0 : index
    %53 = vector.load %arg6[%c0_54, %c0_55, %c1_56, %c0_57, %c0_58] : memref<1x1x4x1x128xf32, #tpu.memory_space<vmem>>, vector<1x1x1x1x128xf32>
    %54 = vector.shape_cast %53 : vector<1x1x1x1x128xf32> to vector<1x128xf32>
    %55 = vector.shape_cast %52 : vector<1x128xf32> to vector<1x1x1x1x128xf32>
    tpu.vector_store %arg6[%c0_54, %c0_55, %c1_56, %c0_57, %c0_58], %55 {strides = array<i32>} : memref<1x1x4x1x128xf32, #tpu.memory_space<vmem>>, vector<1x1x1x1x128xf32>,
    %c0_59 = arith.constant 0 : index
    %c2 = arith.constant 2 : index
    %c0_60 = arith.constant 0 : index
    %c0_61 = arith.constant 0 : index
    %56 = vector.load %arg4[%c0_59, %c2, %c0_60, %c0_61] : memref<1x4x2x128xf32, #tpu.memory_space<vmem>>, vector<1x1x2x128xf32>
    %57 = vector.shape_cast %56 : vector<1x1x2x128xf32> to vector<2x128xf32>
    %c2_i32 = arith.constant 2 : i32
    %58 = vector.broadcast %c2_i32 : i32 to vector<2x128xi32>
    %59 = arith.cmpi eq, %5, %58 : vector<2x128xi32>
    %cst_62 = arith.constant 0.000000e+00 : f32
    %60 = vector.broadcast %cst_62 : f32 to vector<2x128xf32>
    %61 = arith.select %59, %57, %60 : vector<2x128xi1>, vector<2x128xf32>
    %cst_63 = arith.constant 1.000000e+00 : f32
    %62 = vector.broadcast %cst_63 : f32 to vector<2x128xf32>
    %63 = arith.addf %57, %62 : vector<2x128xf32>
    %64 = arith.select %59, %63, %57 : vector<2x128xi1>, vector<2x128xf32>
    %c0_64 = arith.constant 0 : index
    %c0_65 = arith.constant 0 : index
    %c2_66 = arith.constant 2 : index
    %c0_67 = arith.constant 0 : index
    %c0_68 = arith.constant 0 : index
    %65 = vector.load %arg5[%c0_64, %c0_65, %c2_66, %c0_67, %c0_68] : memref<1x1x4x1x128xf32, #tpu.memory_space<vmem>>, vector<1x1x1x1x128xf32>
    %66 = vector.shape_cast %65 : vector<1x1x1x1x128xf32> to vector<1x128xf32>
    %cst_69 = arith.constant dense<0.000000e+00> : vector<128xf32>
    %67 = vector.multi_reduction <add>, %61, %cst_69 [0] : vector<2x128xf32> to vector<128xf32>
    %68 = vector.shape_cast %67 : vector<128xf32> to vector<1x128xf32>
    %69 = arith.addf %66, %68 : vector<1x128xf32>
    %c0_70 = arith.constant 0 : index
    %c0_71 = arith.constant 0 : index
    %c2_72 = arith.constant 2 : index
    %c0_73 = arith.constant 0 : index
    %c0_74 = arith.constant 0 : index
    %70 = vector.load %arg5[%c0_70, %c0_71, %c2_72, %c0_73, %c0_74] : memref<1x1x4x1x128xf32, #tpu.memory_space<vmem>>, vector<1x1x1x1x128xf32>
    %71 = vector.shape_cast %70 : vector<1x1x1x1x128xf32> to vector<1x128xf32>
    %72 = vector.shape_cast %69 : vector<1x128xf32> to vector<1x1x1x1x128xf32>
    tpu.vector_store %arg5[%c0_70, %c0_71, %c2_72, %c0_73, %c0_74], %72 {strides = array<i32>} : memref<1x1x4x1x128xf32, #tpu.memory_space<vmem>>, vector<1x1x1x1x128xf32>,
    %c0_75 = arith.constant 0 : index
    %c0_76 = arith.constant 0 : index
    %c2_77 = arith.constant 2 : index
    %c0_78 = arith.constant 0 : index
    %c0_79 = arith.constant 0 : index
    %73 = vector.load %arg6[%c0_75, %c0_76, %c2_77, %c0_78, %c0_79] : memref<1x1x4x1x128xf32, #tpu.memory_space<vmem>>, vector<1x1x1x1x128xf32>
    %74 = vector.shape_cast %73 : vector<1x1x1x1x128xf32> to vector<1x128xf32>
    %cst_80 = arith.constant dense<0.000000e+00> : vector<128xf32>
    %75 = vector.multi_reduction <add>, %64, %cst_80 [0] : vector<2x128xf32> to vector<128xf32>
    %76 = vector.shape_cast %75 : vector<128xf32> to vector<1x128xf32>
    %77 = arith.addf %74, %76 : vector<1x128xf32>
    %c0_81 = arith.constant 0 : index
    %c0_82 = arith.constant 0 : index
    %c2_83 = arith.constant 2 : index
    %c0_84 = arith.constant 0 : index
    %c0_85 = arith.constant 0 : index
    %78 = vector.load %arg6[%c0_81, %c0_82, %c2_83, %c0_84, %c0_85] : memref<1x1x4x1x128xf32, #tpu.memory_space<vmem>>, vector<1x1x1x1x128xf32>
    %79 = vector.shape_cast %78 : vector<1x1x1x1x128xf32> to vector<1x128xf32>
    %80 = vector.shape_cast %77 : vector<1x128xf32> to vector<1x1x1x1x128xf32>
    tpu.vector_store %arg6[%c0_81, %c0_82, %c2_83, %c0_84, %c0_85], %80 {strides = array<i32>} : memref<1x1x4x1x128xf32, #tpu.memory_space<vmem>>, vector<1x1x1x1x128xf32>,
    %c0_86 = arith.constant 0 : index
    %c3 = arith.constant 3 : index
    %c0_87 = arith.constant 0 : index
    %c0_88 = arith.constant 0 : index
    %81 = vector.load %arg4[%c0_86, %c3, %c0_87, %c0_88] : memref<1x4x2x128xf32, #tpu.memory_space<vmem>>, vector<1x1x2x128xf32>
    %82 = vector.shape_cast %81 : vector<1x1x2x128xf32> to vector<2x128xf32>
    %c3_i32 = arith.constant 3 : i32
    %83 = vector.broadcast %c3_i32 : i32 to vector<2x128xi32>
    %84 = arith.cmpi eq, %5, %83 : vector<2x128xi32>
    %cst_89 = arith.constant 0.000000e+00 : f32
    %85 = vector.broadcast %cst_89 : f32 to vector<2x128xf32>
    %86 = arith.select %84, %82, %85 : vector<2x128xi1>, vector<2x128xf32>
    %cst_90 = arith.constant 1.000000e+00 : f32
    %87 = vector.broadcast %cst_90 : f32 to vector<2x128xf32>
    %88 = arith.addf %82, %87 : vector<2x128xf32>
    %89 = arith.select %84, %88, %82 : vector<2x128xi1>, vector<2x128xf32>
    %c0_91 = arith.constant 0 : index
    %c0_92 = arith.constant 0 : index
    %c3_93 = arith.constant 3 : index
    %c0_94 = arith.constant 0 : index
    %c0_95 = arith.constant 0 : index
    %90 = vector.load %arg5[%c0_91, %c0_92, %c3_93, %c0_94, %c0_95] : memref<1x1x4x1x128xf32, #tpu.memory_space<vmem>>, vector<1x1x1x1x128xf32>
    %91 = vector.shape_cast %90 : vector<1x1x1x1x128xf32> to vector<1x128xf32>
    %cst_96 = arith.constant dense<0.000000e+00> : vector<128xf32>
    %92 = vector.multi_reduction <add>, %86, %cst_96 [0] : vector<2x128xf32> to vector<128xf32>
    %93 = vector.shape_cast %92 : vector<128xf32> to vector<1x128xf32>
    %94 = arith.addf %91, %93 : vector<1x128xf32>
    %c0_97 = arith.constant 0 : index
    %c0_98 = arith.constant 0 : index
    %c3_99 = arith.constant 3 : index
    %c0_100 = arith.constant 0 : index
    %c0_101 = arith.constant 0 : index
    %95 = vector.load %arg5[%c0_97, %c0_98, %c3_99, %c0_100, %c0_101] : memref<1x1x4x1x128xf32, #tpu.memory_space<vmem>>, vector<1x1x1x1x128xf32>
    %96 = vector.shape_cast %95 : vector<1x1x1x1x128xf32> to vector<1x128xf32>
    %97 = vector.shape_cast %94 : vector<1x128xf32> to vector<1x1x1x1x128xf32>
    tpu.vector_store %arg5[%c0_97, %c0_98, %c3_99, %c0_100, %c0_101], %97 {strides = array<i32>} : memref<1x1x4x1x128xf32, #tpu.memory_space<vmem>>, vector<1x1x1x1x128xf32>,
    %c0_102 = arith.constant 0 : index
    %c0_103 = arith.constant 0 : index
    %c3_104 = arith.constant 3 : index
    %c0_105 = arith.constant 0 : index
    %c0_106 = arith.constant 0 : index
    %98 = vector.load %arg6[%c0_102, %c0_103, %c3_104, %c0_105, %c0_106] : memref<1x1x4x1x128xf32, #tpu.memory_space<vmem>>, vector<1x1x1x1x128xf32>
    %99 = vector.shape_cast %98 : vector<1x1x1x1x128xf32> to vector<1x128xf32>
    %cst_107 = arith.constant dense<0.000000e+00> : vector<128xf32>
    %100 = vector.multi_reduction <add>, %89, %cst_107 [0] : vector<2x128xf32> to vector<128xf32>
    %101 = vector.shape_cast %100 : vector<128xf32> to vector<1x128xf32>
    %102 = arith.addf %99, %101 : vector<1x128xf32>
    %c0_108 = arith.constant 0 : index
    %c0_109 = arith.constant 0 : index
    %c3_110 = arith.constant 3 : index
    %c0_111 = arith.constant 0 : index
    %c0_112 = arith.constant 0 : index
    %103 = vector.load %arg6[%c0_108, %c0_109, %c3_110, %c0_111, %c0_112] : memref<1x1x4x1x128xf32, #tpu.memory_space<vmem>>, vector<1x1x1x1x128xf32>
    %104 = vector.shape_cast %103 : vector<1x1x1x1x128xf32> to vector<1x128xf32>
    %105 = vector.shape_cast %102 : vector<1x128xf32> to vector<1x1x1x1x128xf32>
    tpu.vector_store %arg6[%c0_108, %c0_109, %c3_110, %c0_111, %c0_112], %105 {strides = array<i32>} : memref<1x1x4x1x128xf32, #tpu.memory_space<vmem>>, vector<1x1x1x1x128xf32>,
    return
  }
  func.func @transform_0(%arg0: i32, %arg1: i32, %arg2: i32) -> (i32, i32, i32, i32) {
    %c1_i32 = arith.constant 1 : i32
    %0 = arith.muli %arg1, %c1_i32 : i32
    %1 = arith.addi %0, %arg2 : i32
    %c0_i32 = arith.constant 0 : i32
    %c0_i32_0 = arith.constant 0 : i32
    %c0_i32_1 = arith.constant 0 : i32
    return %arg0, %c0_i32, %1, %c0_i32_0 : i32, i32, i32, i32
  }
  func.func @transform_1(%arg0: i32, %arg1: i32, %arg2: i32) -> (i32, i32, i32, i32) {
    %c1_i32 = arith.constant 1 : i32
    %0 = arith.muli %arg1, %c1_i32 : i32
    %1 = arith.addi %0, %arg2 : i32
    %c0_i32 = arith.constant 0 : i32
    %c0_i32_0 = arith.constant 0 : i32
    %c0_i32_1 = arith.constant 0 : i32
    return %arg0, %c0_i32, %1, %c0_i32_0 : i32, i32, i32, i32
  }
  func.func @transform_2(%arg0: i32, %arg1: i32, %arg2: i32) -> (i32, i32, i32, i32, i32) {
    %c0_i32 = arith.constant 0 : i32
    %c0_i32_0 = arith.constant 0 : i32
    %c0_i32_1 = arith.constant 0 : i32
    %c0_i32_2 = arith.constant 0 : i32
    return %arg0, %arg1, %c0_i32, %c0_i32_0, %c0_i32_1 : i32, i32, i32, i32, i32
  }
  func.func @transform_3(%arg0: i32, %arg1: i32, %arg2: i32) -> (i32, i32, i32, i32, i32) {
    %c0_i32 = arith.constant 0 : i32
    %c0_i32_0 = arith.constant 0 : i32
    %c0_i32_1 = arith.constant 0 : i32
    %c0_i32_2 = arith.constant 0 : i32
    return %arg0, %arg1, %c0_i32, %c0_i32_0, %c0_i32_1 : i32, i32, i32, i32, i32
  }
}

</mosaic_0001>

<llo_original>
// kernel: dice_loss.1
$region0: #{dice_loss.1}
  #allocation0 [shape = 'u32[]', space=smem, size = 0x4, offset = 0x4, fixed_abs, tag = 'smem constant byte address 0x4 - core index']
  #allocation1 [shape = 'u32[72,128]{1,0:T(1,128)}', space=vmem, size = 0x9000, scoped, tag = 'internal scratch']
  %s0 = inlined_call_operand.vmem [shape: s8[2,1,2,128], index: 0, kind: input, shape index: {}]
  %s1 = inlined_call_operand.vmem [shape: f32[2,4,2,128], index: 1, kind: input, shape index: {}]
  %s2 = inlined_call_operand.vmem [shape: f32[2,1,4,1,128], index: 2, kind: output, shape index: {0}]
  %s3 = inlined_call_operand.vmem [shape: f32[2,1,4,1,128], index: 3, kind: output, shape index: {1}]
  %4 = xla_tuple %s2, %s3
  %s5 = sld [smem:[#allocation0]]
  $region53: #{dice_loss.1} parent=0
    _
  %s7 = ssub.s32 1, %s5
  %s8 = scalar_select 0, %s7, %s5
  loop: start=0, step=1, limit=4
  $region2: #{dice_loss.1} parent=0 // loop_pre_header
    _
  $region3: #{dice_loss.1} parent=0 // loop_header
    %s10 = sphi 0, %s14
    %p11 = scmp.ge.s32.totalorder %s10, 4
    %s17 = sphi 0, %s36
    %s18 = sphi 0, %s32
    %s19 = sphi 0, %s28
    %s20 = sphi 0, %s17
    %s21 = sphi 0, %s18
    %s22 = sphi 0, %s19
    %s23 = sphi 0, %s20
    %s24 = sphi 0, %s21
    %s25 = sphi 0, %s22
    %s43 = sphi 0, %s45
    %s46 = sphi 0, %s43
    %s47 = sphi 0, %s46
    %s63 = sphi 0, %s47
    %s73 = sphi 0, %s75
    %s76 = sphi 0, %s73
    %s77 = sphi 0, %s76
    %s93 = sphi 0, %s77
    %s101 = sphi 0, %s103
    %s104 = sphi 0, %s101
    %s105 = sphi 0, %s104
    %s121 = sphi 0, %s105
    %s129 = sphi 0, %s131
    %s132 = sphi 0, %s129
    %s133 = sphi 0, %s132
    %s149 = sphi 0, %s133
  $region4: #{dice_loss.1} parent=0 // loop_header_branch
    %13 = sbr.rel (%p11) target = $region8
  $region5: #{dice_loss.1} parent=0 // loop_body
    %s15 = ssub.s32 %s10, 1
    %s16 = ssub.s32 %s10, 2
    %s26 = sadd.s32 1, %s19
    %p27 = scmp.ge.s32.totalorder %s26, 1
    %s28 = scalar_select %p27, 0, %s26
    %s29 = sadd.s32 1, %s18
    %s30 = scalar_select %p27, %s29, %s18
    %p31 = scmp.ge.s32.totalorder %s30, 1
    %s32 = scalar_select %p31, 0, %s30
    %s33 = sadd.s32 1, %s17
    %s34 = scalar_select %p31, %s33, %s17
    %p35 = scmp.ge.s32.totalorder %s34, 2
    %s36 = scalar_select %p35, 0, %s34
    %s37 = sadd.s32 %s18, %s19
    %s38 = sadd.s32 %s32, %s28
    %s39 = ssub.s32 %s17, %s36
    %s40 = ssub.s32 %s37, %s38
    %s41 = sor.u32 %s39, %s40
    %p42 = scmp.eq.s32.totalorder %s41, 0
    %s44 = sadd.s32 %s43, 1
    %s45 = scalar_select %p42, %s43, %s44
    %p48 = pneg %p42
    %p49 = scmp.eq.s32.totalorder %s10, 1
    %p50 = por %p48, %p49
    %p51 = scmp.ne.s32.totalorder %s43, %s46
    %p52 = scmp.eq.s32.totalorder %s10, 0
    %p53 = por %p51, %p52
    %p54 = scmp.ne.s32.totalorder %s43, %s46
    %p55 = scmp.eq.s32.totalorder %s15, 1
    %p56 = por %p54, %p55
    %p57 = scmp.ne.s32.totalorder %s46, %s47
    %p58 = scmp.eq.s32.totalorder %s15, 0
    %p59 = por %p57, %p58
    %p60 = scmp.ne.s32.totalorder %s46, %s47
    %p61 = scmp.eq.s32.totalorder %s16, 1
    %p62 = por %p60, %p61
    %p64 = scmp.ne.s32.totalorder %s47, %s63
    %p65 = scmp.eq.s32.totalorder %s16, 0
    %p66 = por %p64, %p65
    %s67 = sadd.s32 %s18, %s19
    %s68 = sadd.s32 %s32, %s28
    %s69 = ssub.s32 %s17, %s36
    %s70 = ssub.s32 %s67, %s68
    %s71 = sor.u32 %s69, %s70
    %p72 = scmp.eq.s32.totalorder %s71, 0
    %s74 = sadd.s32 %s73, 1
    %s75 = scalar_select %p72, %s73, %s74
    %p78 = pneg %p72
    %p79 = scmp.eq.s32.totalorder %s10, 1
    %p80 = por %p78, %p79
    %p81 = scmp.ne.s32.totalorder %s73, %s76
    %p82 = scmp.eq.s32.totalorder %s10, 0
    %p83 = por %p81, %p82
    %p84 = scmp.ne.s32.totalorder %s73, %s76
    %p85 = scmp.eq.s32.totalorder %s15, 1
    %p86 = por %p84, %p85
    %p87 = scmp.ne.s32.totalorder %s76, %s77
    %p88 = scmp.eq.s32.totalorder %s15, 0
    %p89 = por %p87, %p88
    %p90 = scmp.ne.s32.totalorder %s76, %s77
    %p91 = scmp.eq.s32.totalorder %s16, 1
    %p92 = por %p90, %p91
    %p94 = scmp.ne.s32.totalorder %s77, %s93
    %p95 = scmp.eq.s32.totalorder %s16, 0
    %p96 = por %p94, %p95
    %s97 = ssub.s32 %s17, %s36
    %s98 = ssub.s32 %s18, %s32
    %s99 = sor.u32 %s97, %s98
    %p100 = scmp.eq.s32.totalorder %s99, 0
    %s102 = sadd.s32 %s101, 1
    %s103 = scalar_select %p100, %s101, %s102
    %p106 = pneg %p100
    %p107 = scmp.eq.s32.totalorder %s10, 1
    %p108 = por %p106, %p107
    %p109 = scmp.ne.s32.totalorder %s101, %s104
    %p110 = scmp.eq.s32.totalorder %s10, 0
    %p111 = por %p109, %p110
    %p112 = scmp.ne.s32.totalorder %s101, %s104
    %p113 = scmp.eq.s32.totalorder %s15, 1
    %p114 = por %p112, %p113
    %p115 = scmp.ne.s32.totalorder %s104, %s105
    %p116 = scmp.eq.s32.totalorder %s15, 0
    %p117 = por %p115, %p116
    %p118 = scmp.ne.s32.totalorder %s104, %s105
    %p119 = scmp.eq.s32.totalorder %s16, 1
    %p120 = por %p118, %p119
    %p122 = scmp.ne.s32.totalorder %s105, %s121
    %p123 = scmp.eq.s32.totalorder %s16, 0
    %p124 = por %p122, %p123
    %s125 = ssub.s32 %s17, %s36
    %s126 = ssub.s32 %s18, %s32
    %s127 = sor.u32 %s125, %s126
    %p128 = scmp.eq.s32.totalorder %s127, 0
    %s130 = sadd.s32 %s129, 1
    %s131 = scalar_select %p128, %s129, %s130
    %p134 = pneg %p128
    %p135 = scmp.eq.s32.totalorder %s10, 1
    %p136 = por %p134, %p135
    %p137 = scmp.ne.s32.totalorder %s129, %s132
    %p138 = scmp.eq.s32.totalorder %s10, 0
    %p139 = por %p137, %p138
    %p140 = scmp.ne.s32.totalorder %s129, %s132
    %p141 = scmp.eq.s32.totalorder %s15, 1
    %p142 = por %p140, %p141
    %p143 = scmp.ne.s32.totalorder %s132, %s133
    %p144 = scmp.eq.s32.totalorder %s15, 0
    %p145 = por %p143, %p144
    %p146 = scmp.ne.s32.totalorder %s132, %s133
    %p147 = scmp.eq.s32.totalorder %s16, 1
    %p148 = por %p146, %p147
    %p150 = scmp.ne.s32.totalorder %s133, %s149
    %p151 = scmp.eq.s32.totalorder %s16, 0
    %p152 = por %p150, %p151
    %p153 = scmp.le.s32.totalorder 1, %s10
    %p154 = scmp.lt.s32.totalorder %s10, 3
    %p155 = pnand %p153, %p154
    %p156 = pneg %p155
    // Predicated region
    $region9: #{dice_loss.1} parent=5 // pred_check
      _
    $region10: #{dice_loss.1} parent=5 // pred_check_branch
      %158 = sbr.rel (%p155) target = $region12
    $region11: #{dice_loss.1} parent=5 // pred_region
      %s159 = ssub.s32 %s10, 1
    $region12: #{dice_loss.1} parent=5 // pred_fallthru
      _
    %p160 = scmp.lt.s32.totalorder %s10, 2
    // Predicated region
    $region13: #{dice_loss.1} parent=5 // pred_check
      %p161 = pneg %p160
    $region14: #{dice_loss.1} parent=5 // pred_check_branch
      %163 = sbr.rel (%p161) target = $region16
    $region15: #{dice_loss.1} parent=5 // pred_region
      // Predicated region
      $region17: #{dice_loss.1} parent=15 // pred_check
        %p164 = pneg %p53
      $region18: #{dice_loss.1} parent=15 // pred_check_branch
        %166 = sbr.rel (%p164) target = $region20
      $region19: #{dice_loss.1} parent=15 // pred_region
        %s167 = sadd.s32 %s18, %s19
        %p168 = scmp.lt.s32.totalorder %s17, 1
        %s169 = scalar_select %p168, %s17, 1
        %p170 = scmp.lt.s32.totalorder %s167, 0
        %s171 = scalar_select %p170, %s167, 0
        %s172 = sadd.s32 %s171, %s169
        %s173 = scalar_lea.vmem %s0, %s172
        %s174 = sadd.s32 %s18, %s19
      $region20: #{dice_loss.1} parent=15 // pred_fallthru
        _
      // Predicated region
      $region21: #{dice_loss.1} parent=15 // pred_check
        %p175 = pneg %p83
      $region22: #{dice_loss.1} parent=15 // pred_check_branch
        %177 = sbr.rel (%p175) target = $region24
      $region23: #{dice_loss.1} parent=15 // pred_region
        %s178 = sadd.s32 %s18, %s19
        %p179 = scmp.lt.s32.totalorder %s17, 1
        %s180 = scalar_select %p179, %s17, 1
        %p181 = scmp.lt.s32.totalorder %s178, 0
        %s182 = scalar_select %p181, %s178, 0
        %s183 = smul.addr %s180, 4
        %s184 = sadd.s32 %s182, %s183
        %s185 = smul.addr %s184, 2
        %s186 = scalar_lea.vmem %s1, %s185
        %s187 = sadd.s32 %s18, %s19
      $region24: #{dice_loss.1} parent=15 // pred_fallthru
        _
    $region16: #{dice_loss.1} parent=5 // pred_fallthru
      _
    %p188 = scmp.le.s32.totalorder 1, %s10
    %p189 = scmp.lt.s32.totalorder %s10, 3
    %p190 = pnand %p188, %p189
    %p191 = pneg %p190
    // Predicated region
    $region25: #{dice_loss.1} parent=5 // pred_check
      _
    $region26: #{dice_loss.1} parent=5 // pred_check_branch
      %193 = sbr.rel (%p190) target = $region28
    $region27: #{dice_loss.1} parent=5 // pred_region
      %s194 = ssub.s32 %s10, 1
      %s195 = sadd.s32 %s21, %s22
      %p196 = scmp.lt.s32.totalorder %s20, 1
      %s197 = scalar_select %p196, %s20, 1
      %p198 = scmp.lt.s32.totalorder %s195, 0
      %s199 = scalar_select %p198, %s195, 0
      %s200 = sadd.s32 %s199, %s197
      %s201 = scalar_lea.vmem %s0, %s200
      %p202 = pneg %p59
      %p203 = pneg %p56
      %s204 = sadd.s32 %s21, %s22
      %p205 = scmp.lt.s32.totalorder %s20, 1
      %s206 = scalar_select %p205, %s20, 1
      %p207 = scmp.lt.s32.totalorder %s204, 0
      %s208 = scalar_select %p207, %s204, 0
      %s209 = smul.addr %s206, 4
      %s210 = sadd.s32 %s208, %s209
      %s211 = smul.addr %s210, 2
      %s212 = scalar_lea.vmem %s1, %s211
      %p213 = pneg %p89
      %p214 = pneg %p86
      %p215 = pneg %p117
      %p216 = pneg %p114
      %p217 = scmp.lt.s32.totalorder %s20, 1
      %s218 = scalar_select %p217, %s20, 1
      %p219 = scmp.lt.s32.totalorder %s21, 0
      %s220 = scalar_select %p219, %s21, 0
      %s221 = smul.addr %s220, 4
      %s222 = smul.addr %s218, 4
      %s223 = sadd.s32 %s221, %s222
      %s224 = scalar_lea.vmem %s2, %s223
      %p225 = pneg %p145
      %p226 = pneg %p142
      %p227 = scmp.lt.s32.totalorder %s20, 1
      %s228 = scalar_select %p227, %s20, 1
      %p229 = scmp.lt.s32.totalorder %s21, 0
      %s230 = scalar_select %p229, %s21, 0
      %s231 = smul.addr %s230, 4
      %s232 = smul.addr %s228, 4
      %s233 = sadd.s32 %s231, %s232
      %s234 = scalar_lea.vmem %s3, %s233
      %s235 = sadd.s32 %s21, %s22
      %p236 = scmp.lt.s32.totalorder %s20, 1
      %s237 = scalar_select %p236, %s20, 1
      %p238 = scmp.lt.s32.totalorder %s235, 0
      %s239 = scalar_select %p238, %s235, 0
      %s240 = sadd.s32 %s239, %s237
      %s241 = scalar_lea.vmem %s0, %s240
      %s242 = sadd.s32 %s21, %s22
      %s243 = sadd.s32 %s21, %s22
      %p244 = scmp.lt.s32.totalorder %s20, 1
      %s245 = scalar_select %p244, %s20, 1
      %p246 = scmp.lt.s32.totalorder %s243, 0
      %s247 = scalar_select %p246, %s243, 0
      %s248 = smul.addr %s245, 4
      %s249 = sadd.s32 %s247, %s248
      %s250 = smul.addr %s249, 2
      %s251 = scalar_lea.vmem %s1, %s250
      %s252 = sadd.s32 %s21, %s22
      %p253 = scmp.lt.s32.totalorder %s20, 1
      %s254 = scalar_select %p253, %s20, 1
      %p255 = scmp.lt.s32.totalorder %s21, 0
      %s256 = scalar_select %p255, %s21, 0
      %s257 = smul.addr %s256, 4
      %s258 = smul.addr %s254, 4
      %s259 = sadd.s32 %s257, %s258
      %s260 = scalar_lea.vmem %s2, %s259
      %p261 = scmp.lt.s32.totalorder %s20, 1
      %s262 = scalar_select %p261, %s20, 1
      %p263 = scmp.lt.s32.totalorder %s21, 0
      %s264 = scalar_select %p263, %s21, 0
      %s265 = smul.addr %s264, 4
      %s266 = smul.addr %s262, 4
      %s267 = sadd.s32 %s265, %s266
      %s268 = scalar_lea.vmem %s3, %s267
      %p269 = scmp.eq.s32.totalorder %s22, 0
      // Predicated region
      $region29: #{dice_loss.1} parent=27 // pred_check
        %p270 = pneg %p269
      $region30: #{dice_loss.1} parent=27 // pred_check_branch
        %272 = sbr.rel (%p270) target = $region32
      $region31: #{dice_loss.1} parent=27 // pred_region
        %273 = vst [vmem:[%s260] sm:$0x1] 0.0
        %274 = vst [vmem:[%s260 + $0x1] sm:$0x1] 0.0
        %275 = vst [vmem:[%s260 + $0x2] sm:$0x1] 0.0
        %276 = vst [vmem:[%s260 + $0x3] sm:$0x1] 0.0
        %277 = vst [vmem:[%s268] sm:$0x1] 0.0
        %278 = vst [vmem:[%s268 + $0x1] sm:$0x1] 0.0
        %279 = vst [vmem:[%s268 + $0x2] sm:$0x1] 0.0
        %280 = vst [vmem:[%s268 + $0x3] sm:$0x1] 0.0
      $region32: #{dice_loss.1} parent=27 // pred_fallthru
        _
      %v281 = vld [vmem:[%s241] sm:$0x1]
      %v282 = vunpack.c.0.s8 %v281
      %v283 = vld [vmem:[%s251] sm:$0x3]
      %vm284 = vcmp.eq.s32.totalorder %v282, 0
      %v285 = vsel %vm284, %v283, 0.0
      %v286 = vadd.f32 %v283, 1.0
      %v287 = vsel %vm284, %v286, %v283
      %v288 = vld [vmem:[%s260] sm:$0x1]
      %vm289 = vcmask 1041408
      %v290 = vsel %vm289, %v285, 0.0
      %v291 = vrot.slane %v290, 4
      %v292 = vadd.f32 %v290, %v291
      %v293 = vrot.slane %v292, 2
      %v294 = vadd.f32 %v292, %v293
      %v295 = vrot.slane %v294, 1
      %v296 = vadd.f32 %v294, %v295
      %v297 = vadd.f32 %v288, %v296
      %298 = vst [vmem:[%s260] sm:$0x1] %v297
      %v299 = vld [vmem:[%s268] sm:$0x1]
      %v300 = vsel %vm289, %v287, 0.0
      %v301 = vrot.slane %v300, 4
      %v302 = vadd.f32 %v300, %v301
      %v303 = vrot.slane %v302, 2
      %v304 = vadd.f32 %v302, %v303
      %v305 = vrot.slane %v304, 1
      %v306 = vadd.f32 %v304, %v305
      %v307 = vadd.f32 %v299, %v306
      %308 = vst [vmem:[%s268] sm:$0x1] %v307
      %s309 = scalar_lea.vmem %s251, 2
      %v310 = vld [vmem:[%s309] sm:$0x3]
      %vm311 = vcmp.eq.s32.totalorder %v282, 1
      %v312 = vsel %vm311, %v310, 0.0
      %v313 = vadd.f32 %v310, 1.0
      %v314 = vsel %vm311, %v313, %v310
      %s315 = scalar_lea.vmem %s260, 1
      %v316 = vld [vmem:[%s315] sm:$0x1]
      %v317 = vsel %vm289, %v312, 0.0
      %v318 = vrot.slane %v317, 4
      %v319 = vadd.f32 %v317, %v318
      %v320 = vrot.slane %v319, 2
      %v321 = vadd.f32 %v319, %v320
      %v322 = vrot.slane %v321, 1
      %v323 = vadd.f32 %v321, %v322
      %v324 = vadd.f32 %v316, %v323
      %325 = vst [vmem:[%s315] sm:$0x1] %v324
      %s326 = scalar_lea.vmem %s268, 1
      %v327 = vld [vmem:[%s326] sm:$0x1]
      %v328 = vsel %vm289, %v314, 0.0
      %v329 = vrot.slane %v328, 4
      %v330 = vadd.f32 %v328, %v329
      %v331 = vrot.slane %v330, 2
      %v332 = vadd.f32 %v330, %v331
      %v333 = vrot.slane %v332, 1
      %v334 = vadd.f32 %v332, %v333
      %v335 = vadd.f32 %v327, %v334
      %336 = vst [vmem:[%s326] sm:$0x1] %v335
      %s337 = scalar_lea.vmem %s251, 4
      %v338 = vld [vmem:[%s337] sm:$0x3]
      %vm339 = vcmp.eq.s32.totalorder %v282, 2
      %v340 = vsel %vm339, %v338, 0.0
      %v341 = vadd.f32 %v338, 1.0
      %v342 = vsel %vm339, %v341, %v338
      %s343 = scalar_lea.vmem %s260, 2
      %v344 = vld [vmem:[%s343] sm:$0x1]
      %v345 = vsel %vm289, %v340, 0.0
      %v346 = vrot.slane %v345, 4
      %v347 = vadd.f32 %v345, %v346
      %v348 = vrot.slane %v347, 2
      %v349 = vadd.f32 %v347, %v348
      %v350 = vrot.slane %v349, 1
      %v351 = vadd.f32 %v349, %v350
      %v352 = vadd.f32 %v344, %v351
      %353 = vst [vmem:[%s343] sm:$0x1] %v352
      %s354 = scalar_lea.vmem %s268, 2
      %v355 = vld [vmem:[%s354] sm:$0x1]
      %v356 = vsel %vm289, %v342, 0.0
      %v357 = vrot.slane %v356, 4
      %v358 = vadd.f32 %v356, %v357
      %v359 = vrot.slane %v358, 2
      %v360 = vadd.f32 %v358, %v359
      %v361 = vrot.slane %v360, 1
      %v362 = vadd.f32 %v360, %v361
      %v363 = vadd.f32 %v355, %v362
      %364 = vst [vmem:[%s354] sm:$0x1] %v363
      %s365 = scalar_lea.vmem %s251, 6
      %v366 = vld [vmem:[%s365] sm:$0x3]
      %vm367 = vcmp.eq.s32.totalorder %v282, 3
      %v368 = vsel %vm367, %v366, 0.0
      %v369 = vadd.f32 %v366, 1.0
      %v370 = vsel %vm367, %v369, %v366
      %s371 = scalar_lea.vmem %s260, 3
      %v372 = vld [vmem:[%s371] sm:$0x1]
      %v373 = vsel %vm289, %v368, 0.0
      %v374 = vrot.slane %v373, 4
      %v375 = vadd.f32 %v373, %v374
      %v376 = vrot.slane %v375, 2
      %v377 = vadd.f32 %v375, %v376
      %v378 = vrot.slane %v377, 1
      %v379 = vadd.f32 %v377, %v378
      %v380 = vadd.f32 %v372, %v379
      %381 = vst [vmem:[%s371] sm:$0x1] %v380
      %s382 = scalar_lea.vmem %s268, 3
      %v383 = vld [vmem:[%s382] sm:$0x1]
      %v384 = vsel %vm289, %v370, 0.0
      %v385 = vrot.slane %v384, 4
      %v386 = vadd.f32 %v384, %v385
      %v387 = vrot.slane %v386, 2
      %v388 = vadd.f32 %v386, %v387
      %v389 = vrot.slane %v388, 1
      %v390 = vadd.f32 %v388, %v389
      %v391 = vadd.f32 %v383, %v390
      %392 = vst [vmem:[%s382] sm:$0x1] %v391
      %p393 = scmp.lt.s32.totalorder %s20, 1
      %s394 = scalar_select %p393, %s20, 1
      %p395 = scmp.lt.s32.totalorder %s21, 0
      %s396 = scalar_select %p395, %s21, 0
      %s397 = smul.addr %s396, 4
      %s398 = smul.addr %s394, 4
      %s399 = sadd.s32 %s397, %s398
      %s400 = scalar_lea.vmem %s2, %s399
      %p401 = scmp.lt.s32.totalorder %s20, 1
      %s402 = scalar_select %p401, %s20, 1
      %p403 = scmp.lt.s32.totalorder %s21, 0
      %s404 = scalar_select %p403, %s21, 0
      %s405 = smul.addr %s404, 4
      %s406 = smul.addr %s402, 4
      %s407 = sadd.s32 %s405, %s406
      %s408 = scalar_lea.vmem %s3, %s407
      // Predicated region
      $region33: #{dice_loss.1} parent=27 // pred_check
        %p409 = pneg %p114
      $region34: #{dice_loss.1} parent=27 // pred_check_branch
        %411 = sbr.rel (%p409) target = $region36
      $region35: #{dice_loss.1} parent=27 // pred_region
        _
      $region36: #{dice_loss.1} parent=27 // pred_fallthru
        _
      // Predicated region
      $region37: #{dice_loss.1} parent=27 // pred_check
        %p412 = pneg %p142
      $region38: #{dice_loss.1} parent=27 // pred_check_branch
        %414 = sbr.rel (%p412) target = $region40
      $region39: #{dice_loss.1} parent=27 // pred_region
        _
      $region40: #{dice_loss.1} parent=27 // pred_fallthru
        _
    $region28: #{dice_loss.1} parent=5 // pred_fallthru
      _
    %p415 = scmp.le.s32.totalorder 2, %s10
    // Predicated region
    $region41: #{dice_loss.1} parent=5 // pred_check
      %p416 = pneg %p415
    $region42: #{dice_loss.1} parent=5 // pred_check_branch
      %418 = sbr.rel (%p416) target = $region44
    $region43: #{dice_loss.1} parent=5 // pred_region
      %s419 = ssub.s32 %s10, 2
      // Predicated region
      $region45: #{dice_loss.1} parent=43 // pred_check
        %p420 = pneg %p120
      $region46: #{dice_loss.1} parent=43 // pred_check_branch
        %422 = sbr.rel (%p420) target = $region48
      $region47: #{dice_loss.1} parent=43 // pred_region
        %p423 = scmp.lt.s32.totalorder %s23, 1
        %s424 = scalar_select %p423, %s23, 1
        %p425 = scmp.lt.s32.totalorder %s24, 0
        %s426 = scalar_select %p425, %s24, 0
        %s427 = smul.addr %s426, 4
        %s428 = smul.addr %s424, 4
        %s429 = sadd.s32 %s427, %s428
        %s430 = scalar_lea.vmem %s2, %s429
      $region48: #{dice_loss.1} parent=43 // pred_fallthru
        _
      // Predicated region
      $region49: #{dice_loss.1} parent=43 // pred_check
        %p431 = pneg %p148
      $region50: #{dice_loss.1} parent=43 // pred_check_branch
        %433 = sbr.rel (%p431) target = $region52
      $region51: #{dice_loss.1} parent=43 // pred_region
        %p434 = scmp.lt.s32.totalorder %s23, 1
        %s435 = scalar_select %p434, %s23, 1
        %p436 = scmp.lt.s32.totalorder %s24, 0
        %s437 = scalar_select %p436, %s24, 0
        %s438 = smul.addr %s437, 4
        %s439 = smul.addr %s435, 4
        %s440 = sadd.s32 %s438, %s439
        %s441 = scalar_lea.vmem %s3, %s440
      $region52: #{dice_loss.1} parent=43 // pred_fallthru
        _
    $region44: #{dice_loss.1} parent=5 // pred_fallthru
      _
  $region6: #{dice_loss.1} parent=0 // loop_footer
    %s14 = sadd.s32 1, %s10
  $region7: #{dice_loss.1} parent=0 // loop_footer_branch
    %9 = sbr.rel target = $region3
  $region8: #{dice_loss.1} parent=0 // loop_exit
    _

</llo_original>
